<compile_context>
chip_gen: v6e
topology: v6e:2x2x1
jax: 0.10.0
libtpu: 0.0.40
codegen_flags: <defaults>
</compile_context>

<pallas_src>
import functools

import jax
import jax.numpy as jnp
from jax.experimental import pallas as pl
from jax.experimental.pallas import tpu as pltpu


def _round_up(n, m):
    return (n + m - 1) // m * m


def dqn_kernel(x_ref, w1_ref, b1_ref, w2_ref, b2_ref, w3_ref, b3_ref, o_ref):
    # Layer 1: in-kernel f32->bf16 cast of x (MXU operand), f32 accumulation,
    # bias-add + ReLU in f32 on the VPU.
    x = x_ref[...].astype(jnp.bfloat16)
    h1 = jnp.dot(x, w1_ref[...], preferred_element_type=jnp.float32)
    h1 = jnp.maximum(h1 + b1_ref[...], 0.0)
    # Layer 2
    h2 = jnp.dot(h1.astype(jnp.bfloat16), w2_ref[...],
                 preferred_element_type=jnp.float32)
    h2 = jnp.maximum(h2 + b2_ref[...], 0.0)
    # Layer 3 (no activation); output keeps the true n_actions width.
    out = jnp.dot(h2.astype(jnp.bfloat16), w3_ref[...],
                  preferred_element_type=jnp.float32)
    o_ref[...] = (out + b3_ref[...]).astype(o_ref.dtype)


def _choose_batch_tiling(B, max_tile):
    """Pick (Bp, TB, num_tiles): as few grid steps as possible, but an even
    grid of >= 2 steps when the batch is large enough (v7x megacore)."""
    Bp = _round_up(B, 16)                      # bf16 sublane packing (16 rows/vreg)
    if Bp <= 128:
        return Bp, Bp, 1                       # too small to split across TCs
    num_tiles = max(2, pl.cdiv(Bp, max_tile))
    if num_tiles % 2:
        num_tiles += 1                         # even -> shards over both v7x TCs
    align = 256 if Bp >= 256 * num_tiles else 16   # 256-wide MXU on v6e/v7x
    TB = _round_up(pl.cdiv(Bp, num_tiles), align)
    return TB * num_tiles, TB, num_tiles


@functools.partial(jax.jit, static_argnames=("batch_tile", "single_buffer_weights"))
def dqn_forward(x, params, *, batch_tile=1024, single_buffer_weights=True):
    """x: (B, n_observations) float32. Returns (B, n_actions) float32 Q-values."""
    w1, b1 = params["w1"], params["b1"]
    w2, b2 = params["w2"], params["b2"]
    w3, b3 = params["w3"], params["b3"]

    B, n_obs = x.shape
    h_dim = w1.shape[1]
    n_actions = w3.shape[1]

    Bp, TB, num_tiles = _choose_batch_tiling(B, batch_tile)
    if Bp != B:
        # Padded rows produce garbage Q-values (relu(b1) propagates); they are
        # sliced off below and out_padded is never consumed directly.
        x = jnp.pad(x, ((0, Bp - B), (0, 0)))

    # Grid-invariant weight/bias blocks stay VMEM-resident across grid steps.
    # Single-buffer them when supported: double-buffering a constant block only
    # doubles resident VMEM (critical on v7x's 64 MiB at large h_dim).
    if single_buffer_weights:
        resident = lambda shape: pl.BlockSpec(
            shape, lambda i: (0, 0), pipeline_mode=pl.Buffered(1))
        w_bufs = 1
    else:
        resident = lambda shape: pl.BlockSpec(shape, lambda i: (0, 0))
        w_bufs = 2

    # ---- VMEM budget: buffered resident weights + double-buffered x/out tiles
    #      + f32 intermediates, with ~1.5x margin; capped with headroom below
    #      v7x's 64 MiB physical VMEM (v5e/v6e have 128 MiB so this is safe). ----
    weight_bytes = w_bufs * ((w1.size + w2.size + w3.size) * 2
                             + (b1.size + b2.size + b3.size) * 4)
    tile_bytes = 2 * (TB * n_obs * 4 + TB * n_actions * 4)
    interm_bytes = 3 * TB * h_dim * 4
    need = weight_bytes + tile_bytes + interm_bytes
    vmem_limit = int(min(max(need + need // 2, 32 * 1024 * 1024),
                         56 * 1024 * 1024))

    flops = 2 * Bp * (n_obs * h_dim + h_dim * h_dim + h_dim * n_actions)
    bytes_accessed = (Bp * n_obs * 4
                      + (w1.size + w2.size + w3.size) * 2
                      + (b1.size + b2.size + b3.size) * 4
                      + Bp * n_actions * 4)

    out_padded = pl.pallas_call(
        dqn_kernel,
        out_shape=jax.ShapeDtypeStruct((Bp, n_actions), jnp.float32),
        grid=(num_tiles,),
        in_specs=[
            pl.BlockSpec((TB, n_obs), lambda i: (i, 0)),   # x: streamed over batch
            resident(w1.shape), resident(b1.shape),
            resident(w2.shape), resident(b2.shape),
            resident(w3.shape), resident(b3.shape),
        ],
        out_specs=pl.BlockSpec((TB, n_actions), lambda i: (i, 0)),
        compiler_params=pltpu.CompilerParams(
            dimension_semantics=("parallel",),             # shard batch on v7x
            vmem_limit_bytes=vmem_limit,
        ),
        cost_estimate=pl.CostEstimate(
            flops=flops, transcendentals=0, bytes_accessed=bytes_accessed),
    )(x, w1, b1, w2, b2, w3, b3)

    return out_padded[:B]   # drop batch padding; action dim already exact width


def init_dqn_params(key, n_observations, h_dim, n_actions):
    """PyTorch nn.Linear default init (U[-1/sqrt(fan_in), +1/sqrt(fan_in)]).

    Weights stored pre-transposed as (in, out) bfloat16 (MXU operands);
    biases stored as (1, out) float32 (bias add / ReLU stay in f32).
    """
    def linear(k, fan_in, fan_out):
        kw, kb = jax.random.split(k)
        bound = 1.0 / jnp.sqrt(jnp.float32(fan_in))
        w = jax.random.uniform(kw, (fan_in, fan_out), jnp.float32, -bound, bound)
        b = jax.random.uniform(kb, (1, fan_out), jnp.float32, -bound, bound)
        return w.astype(jnp.bfloat16), b

    k1, k2, k3 = jax.random.split(key, 3)
    w1, b1 = linear(k1, n_observations, h_dim)
    w2, b2 = linear(k2, h_dim, h_dim)
    w3, b3 = linear(k3, h_dim, n_actions)
    return {"w1": w1, "b1": b1, "w2": w2, "b2": b2, "w3": w3, "b3": b3}


def dqn_reference(x, p):
    """Pure-JAX reference mirroring the kernel's math (bf16 operands, f32 accum)."""
    h1 = jnp.dot(x.astype(jnp.bfloat16), p["w1"],
                 preferred_element_type=jnp.float32) + p["b1"]
    h1 = jnp.maximum(h1, 0.0)
    h2 = jnp.dot(h1.astype(jnp.bfloat16), p["w2"],
                 preferred_element_type=jnp.float32) + p["b2"]
    h2 = jnp.maximum(h2, 0.0)
    return jnp.dot(h2.astype(jnp.bfloat16), p["w3"],
                   preferred_element_type=jnp.float32) + p["b3"]


if __name__ == "__main__":
    # Small shapes consistent with the module's forward. At these sizes the call
    # is launch-overhead dominated; the tiling / residency / writeback choices
    # pay off at realistic DQN replay-batch and hidden sizes.
    B, n_observations, h_dim, n_actions = 8, 8, 32, 4

    key = jax.random.PRNGKey(0)
    kx, kp = jax.random.split(key)
    x = jax.random.normal(kx, (B, n_observations), jnp.float32)
    params = init_dqn_params(kp, n_observations, h_dim, n_actions)

    try:
        out = jax.block_until_ready(dqn_forward(x, params))
    except Exception:
        # Fallback if this JAX build rejects single-buffered (pl.Buffered(1))
        # pipeline mode on the resident weight blocks.
        out = jax.block_until_ready(
            dqn_forward(x, params, single_buffer_weights=False))

    ref = dqn_reference(x, params)
    assert out.shape == (B, n_actions)
    assert jnp.allclose(out, ref, atol=1e-3, rtol=1e-3), "mismatch vs reference"
    print("KERNEL_OK")
</pallas_src>

<mosaic_0001>
module attributes {stable_mosaic.version = 11 : i64} {
  func.func @dqn_kernel(%arg0: i32, %arg1: memref<16x8xf32, #tpu.memory_space<vmem>>, %arg2: memref<8x32xbf16, #tpu.memory_space<vmem>>, %arg3: memref<1x32xf32, #tpu.memory_space<vmem>>, %arg4: memref<32x32xbf16, #tpu.memory_space<vmem>>, %arg5: memref<1x32xf32, #tpu.memory_space<vmem>>, %arg6: memref<32x4xbf16, #tpu.memory_space<vmem>>, %arg7: memref<1x4xf32, #tpu.memory_space<vmem>>, %arg8: memref<16x4xf32, #tpu.memory_space<vmem>>) attributes {dimension_semantics = [#tpu.dimension_semantics<parallel>], iteration_bounds = array<i64: 1>, scalar_prefetch = 0 : i64, scratch_operands = 0 : i64, tpu.core_type = #tpu.core_type<tc>, window_params = [{transform_indices = @transform_0, window_bounds = array<i64: 16, 8>}, {pipeline_mode = #tpu.pipeline_mode<synchronous>, transform_indices = @transform_1, window_bounds = array<i64: 8, 32>}, {pipeline_mode = #tpu.pipeline_mode<synchronous>, transform_indices = @transform_2, window_bounds = array<i64: 1, 32>}, {pipeline_mode = #tpu.pipeline_mode<synchronous>, transform_indices = @transform_3, window_bounds = array<i64: 32, 32>}, {pipeline_mode = #tpu.pipeline_mode<synchronous>, transform_indices = @transform_4, window_bounds = array<i64: 1, 32>}, {pipeline_mode = #tpu.pipeline_mode<synchronous>, transform_indices = @transform_5, window_bounds = array<i64: 32, 4>}, {pipeline_mode = #tpu.pipeline_mode<synchronous>, transform_indices = @transform_6, window_bounds = array<i64: 1, 4>}, {transform_indices = @transform_7, window_bounds = array<i64: 16, 4>}]} {
    %c0 = arith.constant 0 : index
    %c0_0 = arith.constant 0 : index
    %0 = vector.load %arg1[%c0, %c0_0] : memref<16x8xf32, #tpu.memory_space<vmem>>, vector<16x8xf32>
    %1 = arith.truncf %0 : vector<16x8xf32> to vector<16x8xbf16>
    %c0_1 = arith.constant 0 : index
    %c0_2 = arith.constant 0 : index
    %2 = vector.load %arg2[%c0_1, %c0_2] : memref<8x32xbf16, #tpu.memory_space<vmem>>, vector<8x32xbf16>
    %cst = arith.constant dense<0.000000e+00> : vector<16x32xf32>
    %3 = tpu.matmul %1, %2, %cst {dimension_numbers = #tpu.dot_dimension_numbers<[1], [0], [0], [1], [0, 0, 1, 1], [], []>} : vector<16x8xbf16>, vector<8x32xbf16>, vector<16x32xf32> -> vector<16x32xf32>
    %c0_3 = arith.constant 0 : index
    %c0_4 = arith.constant 0 : index
    %4 = vector.load %arg3[%c0_3, %c0_4] : memref<1x32xf32, #tpu.memory_space<vmem>>, vector<1x32xf32>
    %5 = vector.broadcast %4 : vector<1x32xf32> to vector<16x32xf32>
    %6 = arith.addf %3, %5 : vector<16x32xf32>
    %cst_5 = arith.constant 0.000000e+00 : f32
    %7 = vector.broadcast %cst_5 : f32 to vector<16x32xf32>
    %8 = arith.maximumf %6, %7 : vector<16x32xf32>
    %9 = arith.truncf %8 : vector<16x32xf32> to vector<16x32xbf16>
    %c0_6 = arith.constant 0 : index
    %c0_7 = arith.constant 0 : index
    %10 = vector.load %arg4[%c0_6, %c0_7] : memref<32x32xbf16, #tpu.memory_space<vmem>>, vector<32x32xbf16>
    %cst_8 = arith.constant dense<0.000000e+00> : vector<16x32xf32>
    %11 = tpu.matmul %9, %10, %cst_8 {dimension_numbers = #tpu.dot_dimension_numbers<[1], [0], [0], [1], [0, 0, 1, 1], [], []>} : vector<16x32xbf16>, vector<32x32xbf16>, vector<16x32xf32> -> vector<16x32xf32>
    %c0_9 = arith.constant 0 : index
    %c0_10 = arith.constant 0 : index
    %12 = vector.load %arg5[%c0_9, %c0_10] : memref<1x32xf32, #tpu.memory_space<vmem>>, vector<1x32xf32>
    %13 = vector.broadcast %12 : vector<1x32xf32> to vector<16x32xf32>
    %14 = arith.addf %11, %13 : vector<16x32xf32>
    %cst_11 = arith.constant 0.000000e+00 : f32
    %15 = vector.broadcast %cst_11 : f32 to vector<16x32xf32>
    %16 = arith.maximumf %14, %15 : vector<16x32xf32>
    %17 = arith.truncf %16 : vector<16x32xf32> to vector<16x32xbf16>
    %c0_12 = arith.constant 0 : index
    %c0_13 = arith.constant 0 : index
    %18 = vector.load %arg6[%c0_12, %c0_13] : memref<32x4xbf16, #tpu.memory_space<vmem>>, vector<32x4xbf16>
    %cst_14 = arith.constant dense<0.000000e+00> : vector<16x4xf32>
    %19 = tpu.matmul %17, %18, %cst_14 {dimension_numbers = #tpu.dot_dimension_numbers<[1], [0], [0], [1], [0, 0, 1, 1], [], []>} : vector<16x32xbf16>, vector<32x4xbf16>, vector<16x4xf32> -> vector<16x4xf32>
    %c0_15 = arith.constant 0 : index
    %c0_16 = arith.constant 0 : index
    %20 = vector.load %arg7[%c0_15, %c0_16] : memref<1x4xf32, #tpu.memory_space<vmem>>, vector<1x4xf32>
    %21 = vector.broadcast %20 : vector<1x4xf32> to vector<16x4xf32>
    %22 = arith.addf %19, %21 : vector<16x4xf32>
    %c0_17 = arith.constant 0 : index
    %c0_18 = arith.constant 0 : index
    %23 = vector.load %arg8[%c0_17, %c0_18] : memref<16x4xf32, #tpu.memory_space<vmem>>, vector<16x4xf32>
    tpu.vector_store %arg8[%c0_17, %c0_18], %22 {strides = array<i32>} : memref<16x4xf32, #tpu.memory_space<vmem>>, vector<16x4xf32>,
    return
  }
  func.func @transform_0(%arg0: i32) -> (i32, i32) {
    %c0_i32 = arith.constant 0 : i32
    %c0_i32_0 = arith.constant 0 : i32
    return %arg0, %c0_i32 : i32, i32
  }
  func.func @transform_1(%arg0: i32) -> (i32, i32) {
    %c0_i32 = arith.constant 0 : i32
    %c0_i32_0 = arith.constant 0 : i32
    %c0_i32_1 = arith.constant 0 : i32
    return %c0_i32, %c0_i32_0 : i32, i32
  }
  func.func @transform_2(%arg0: i32) -> (i32, i32) {
    %c0_i32 = arith.constant 0 : i32
    %c0_i32_0 = arith.constant 0 : i32
    %c0_i32_1 = arith.constant 0 : i32
    return %c0_i32, %c0_i32_0 : i32, i32
  }
  func.func @transform_3(%arg0: i32) -> (i32, i32) {
    %c0_i32 = arith.constant 0 : i32
    %c0_i32_0 = arith.constant 0 : i32
    %c0_i32_1 = arith.constant 0 : i32
    return %c0_i32, %c0_i32_0 : i32, i32
  }
  func.func @transform_4(%arg0: i32) -> (i32, i32) {
    %c0_i32 = arith.constant 0 : i32
    %c0_i32_0 = arith.constant 0 : i32
    %c0_i32_1 = arith.constant 0 : i32
    return %c0_i32, %c0_i32_0 : i32, i32
  }
  func.func @transform_5(%arg0: i32) -> (i32, i32) {
    %c0_i32 = arith.constant 0 : i32
    %c0_i32_0 = arith.constant 0 : i32
    %c0_i32_1 = arith.constant 0 : i32
    return %c0_i32, %c0_i32_0 : i32, i32
  }
  func.func @transform_6(%arg0: i32) -> (i32, i32) {
    %c0_i32 = arith.constant 0 : i32
    %c0_i32_0 = arith.constant 0 : i32
    %c0_i32_1 = arith.constant 0 : i32
    return %c0_i32, %c0_i32_0 : i32, i32
  }
  func.func @transform_7(%arg0: i32) -> (i32, i32) {
    %c0_i32 = arith.constant 0 : i32
    %c0_i32_0 = arith.constant 0 : i32
    return %arg0, %c0_i32 : i32, i32
  }
}

module attributes {stable_mosaic.version = 11 : i64} {
  func.func @dqn_kernel(%arg0: i32, %arg1: memref<16x8xf32, #tpu.memory_space<vmem>>, %arg2: memref<8x32xbf16, #tpu.memory_space<vmem>>, %arg3: memref<1x32xf32, #tpu.memory_space<vmem>>, %arg4: memref<32x32xbf16, #tpu.memory_space<vmem>>, %arg5: memref<1x32xf32, #tpu.memory_space<vmem>>, %arg6: memref<32x4xbf16, #tpu.memory_space<vmem>>, %arg7: memref<1x4xf32, #tpu.memory_space<vmem>>, %arg8: memref<16x4xf32, #tpu.memory_space<vmem>>) attributes {dimension_semantics = [#tpu.dimension_semantics<parallel>], iteration_bounds = array<i64: 1>, scalar_prefetch = 0 : i64, scratch_operands = 0 : i64, tpu.core_type = #tpu.core_type<tc>, window_params = [{transform_indices = @transform_0, window_bounds = array<i64: 16, 8>}, {pipeline_mode = #tpu.pipeline_mode<synchronous>, transform_indices = @transform_1, window_bounds = array<i64: 8, 32>}, {pipeline_mode = #tpu.pipeline_mode<synchronous>, transform_indices = @transform_2, window_bounds = array<i64: 1, 32>}, {pipeline_mode = #tpu.pipeline_mode<synchronous>, transform_indices = @transform_3, window_bounds = array<i64: 32, 32>}, {pipeline_mode = #tpu.pipeline_mode<synchronous>, transform_indices = @transform_4, window_bounds = array<i64: 1, 32>}, {pipeline_mode = #tpu.pipeline_mode<synchronous>, transform_indices = @transform_5, window_bounds = array<i64: 32, 4>}, {pipeline_mode = #tpu.pipeline_mode<synchronous>, transform_indices = @transform_6, window_bounds = array<i64: 1, 4>}, {transform_indices = @transform_7, window_bounds = array<i64: 16, 4>}]} {
    %c0 = arith.constant 0 : index
    %c0_0 = arith.constant 0 : index
    %0 = vector.load %arg1[%c0, %c0_0] : memref<16x8xf32, #tpu.memory_space<vmem>>, vector<16x8xf32>
    %1 = arith.truncf %0 : vector<16x8xf32> to vector<16x8xbf16>
    %c0_1 = arith.constant 0 : index
    %c0_2 = arith.constant 0 : index
    %2 = vector.load %arg2[%c0_1, %c0_2] : memref<8x32xbf16, #tpu.memory_space<vmem>>, vector<8x32xbf16>
    %cst = arith.constant dense<0.000000e+00> : vector<16x32xf32>
    %3 = tpu.matmul %1, %2, %cst {dimension_numbers = #tpu.dot_dimension_numbers<[1], [0], [0], [1], [0, 0, 1, 1], [], []>} : vector<16x8xbf16>, vector<8x32xbf16>, vector<16x32xf32> -> vector<16x32xf32>
    %c0_3 = arith.constant 0 : index
    %c0_4 = arith.constant 0 : index
    %4 = vector.load %arg3[%c0_3, %c0_4] : memref<1x32xf32, #tpu.memory_space<vmem>>, vector<1x32xf32>
    %5 = vector.broadcast %4 : vector<1x32xf32> to vector<16x32xf32>
    %6 = arith.addf %3, %5 : vector<16x32xf32>
    %cst_5 = arith.constant 0.000000e+00 : f32
    %7 = vector.broadcast %cst_5 : f32 to vector<16x32xf32>
    %8 = arith.maximumf %6, %7 : vector<16x32xf32>
    %9 = arith.truncf %8 : vector<16x32xf32> to vector<16x32xbf16>
    %c0_6 = arith.constant 0 : index
    %c0_7 = arith.constant 0 : index
    %10 = vector.load %arg4[%c0_6, %c0_7] : memref<32x32xbf16, #tpu.memory_space<vmem>>, vector<32x32xbf16>
    %cst_8 = arith.constant dense<0.000000e+00> : vector<16x32xf32>
    %11 = tpu.matmul %9, %10, %cst_8 {dimension_numbers = #tpu.dot_dimension_numbers<[1], [0], [0], [1], [0, 0, 1, 1], [], []>} : vector<16x32xbf16>, vector<32x32xbf16>, vector<16x32xf32> -> vector<16x32xf32>
    %c0_9 = arith.constant 0 : index
    %c0_10 = arith.constant 0 : index
    %12 = vector.load %arg5[%c0_9, %c0_10] : memref<1x32xf32, #tpu.memory_space<vmem>>, vector<1x32xf32>
    %13 = vector.broadcast %12 : vector<1x32xf32> to vector<16x32xf32>
    %14 = arith.addf %11, %13 : vector<16x32xf32>
    %cst_11 = arith.constant 0.000000e+00 : f32
    %15 = vector.broadcast %cst_11 : f32 to vector<16x32xf32>
    %16 = arith.maximumf %14, %15 : vector<16x32xf32>
    %17 = arith.truncf %16 : vector<16x32xf32> to vector<16x32xbf16>
    %c0_12 = arith.constant 0 : index
    %c0_13 = arith.constant 0 : index
    %18 = vector.load %arg6[%c0_12, %c0_13] : memref<32x4xbf16, #tpu.memory_space<vmem>>, vector<32x4xbf16>
    %cst_14 = arith.constant dense<0.000000e+00> : vector<16x4xf32>
    %19 = tpu.matmul %17, %18, %cst_14 {dimension_numbers = #tpu.dot_dimension_numbers<[1], [0], [0], [1], [0, 0, 1, 1], [], []>} : vector<16x32xbf16>, vector<32x4xbf16>, vector<16x4xf32> -> vector<16x4xf32>
    %c0_15 = arith.constant 0 : index
    %c0_16 = arith.constant 0 : index
    %20 = vector.load %arg7[%c0_15, %c0_16] : memref<1x4xf32, #tpu.memory_space<vmem>>, vector<1x4xf32>
    %21 = vector.broadcast %20 : vector<1x4xf32> to vector<16x4xf32>
    %22 = arith.addf %19, %21 : vector<16x4xf32>
    %c0_17 = arith.constant 0 : index
    %c0_18 = arith.constant 0 : index
    %23 = vector.load %arg8[%c0_17, %c0_18] : memref<16x4xf32, #tpu.memory_space<vmem>>, vector<16x4xf32>
    tpu.vector_store %arg8[%c0_17, %c0_18], %22 {strides = array<i32>} : memref<16x4xf32, #tpu.memory_space<vmem>>, vector<16x4xf32>,
    return
  }
  func.func @transform_0(%arg0: i32) -> (i32, i32) {
    %c0_i32 = arith.constant 0 : i32
    %c0_i32_0 = arith.constant 0 : i32
    return %arg0, %c0_i32 : i32, i32
  }
  func.func @transform_1(%arg0: i32) -> (i32, i32) {
    %c0_i32 = arith.constant 0 : i32
    %c0_i32_0 = arith.constant 0 : i32
    %c0_i32_1 = arith.constant 0 : i32
    return %c0_i32, %c0_i32_0 : i32, i32
  }
  func.func @transform_2(%arg0: i32) -> (i32, i32) {
    %c0_i32 = arith.constant 0 : i32
    %c0_i32_0 = arith.constant 0 : i32
    %c0_i32_1 = arith.constant 0 : i32
    return %c0_i32, %c0_i32_0 : i32, i32
  }
  func.func @transform_3(%arg0: i32) -> (i32, i32) {
    %c0_i32 = arith.constant 0 : i32
    %c0_i32_0 = arith.constant 0 : i32
    %c0_i32_1 = arith.constant 0 : i32
    return %c0_i32, %c0_i32_0 : i32, i32
  }
  func.func @transform_4(%arg0: i32) -> (i32, i32) {
    %c0_i32 = arith.constant 0 : i32
    %c0_i32_0 = arith.constant 0 : i32
    %c0_i32_1 = arith.constant 0 : i32
    return %c0_i32, %c0_i32_0 : i32, i32
  }
  func.func @transform_5(%arg0: i32) -> (i32, i32) {
    %c0_i32 = arith.constant 0 : i32
    %c0_i32_0 = arith.constant 0 : i32
    %c0_i32_1 = arith.constant 0 : i32
    return %c0_i32, %c0_i32_0 : i32, i32
  }
  func.func @transform_6(%arg0: i32) -> (i32, i32) {
    %c0_i32 = arith.constant 0 : i32
    %c0_i32_0 = arith.constant 0 : i32
    %c0_i32_1 = arith.constant 0 : i32
    return %c0_i32, %c0_i32_0 : i32, i32
  }
  func.func @transform_7(%arg0: i32) -> (i32, i32) {
    %c0_i32 = arith.constant 0 : i32
    %c0_i32_0 = arith.constant 0 : i32
    return %arg0, %c0_i32 : i32, i32
  }
}

</mosaic_0001>

<llo_original>
// kernel: dqn_forward.1
$region0: #{dqn_forward.1}
  #allocation0 [shape = 'u32[]', space=smem, size = 0x4, offset = 0x4, fixed_abs, tag = 'smem constant byte address 0x4 - core index']
  #allocation1 [shape = 'u32[144,128]{1,0:T(1,128)}', space=vmem, size = 0x12000, scoped, tag = 'internal scratch']
  %s0 = inlined_call_operand.vmem [shape: f32[16,8], index: 0, kind: input, shape index: {}]
  %s1 = inlined_call_operand.vmem [shape: bf16[8,32], index: 1, kind: input, shape index: {}]
  %s2 = inlined_call_operand.vmem [shape: f32[1,32], index: 2, kind: input, shape index: {}]
  %s3 = inlined_call_operand.vmem [shape: bf16[32,32], index: 3, kind: input, shape index: {}]
  %s4 = inlined_call_operand.vmem [shape: f32[1,32], index: 4, kind: input, shape index: {}]
  %s5 = inlined_call_operand.vmem [shape: bf16[32,4], index: 5, kind: input, shape index: {}]
  %s6 = inlined_call_operand.vmem [shape: f32[1,4], index: 6, kind: input, shape index: {}]
  %s7 = inlined_call_operand.vmem [shape: f32[16,4], index: 7, kind: output, shape index: {}]
  %s8 = sld [smem:[#allocation0]]
  $region38: #{dqn_forward.1} parent=0
    _
  %s10 = ssub.s32 1, %s8
  %s11 = scalar_select 0, %s10, %s8
  // Predicated region
  $region2: #{dqn_forward.1} parent=0 // pred_check
    _
  $region3: #{dqn_forward.1} parent=0 // pred_check_branch
    %13 = sbr.rel (0) target = $region5
  $region4: #{dqn_forward.1} parent=0 // pred_region
    _
  $region5: #{dqn_forward.1} parent=0 // pred_fallthru
    _
  // Predicated region
  $region6: #{dqn_forward.1} parent=0 // pred_check
    _
  $region7: #{dqn_forward.1} parent=0 // pred_check_branch
    %15 = sbr.rel (0) target = $region9
  $region8: #{dqn_forward.1} parent=0 // pred_region
    _
  $region9: #{dqn_forward.1} parent=0 // pred_fallthru
    _
  // Predicated region
  $region10: #{dqn_forward.1} parent=0 // pred_check
    _
  $region11: #{dqn_forward.1} parent=0 // pred_check_branch
    %17 = sbr.rel (0) target = $region13
  $region12: #{dqn_forward.1} parent=0 // pred_region
    _
  $region13: #{dqn_forward.1} parent=0 // pred_fallthru
    _
  // Predicated region
  $region14: #{dqn_forward.1} parent=0 // pred_check
    _
  $region15: #{dqn_forward.1} parent=0 // pred_check_branch
    %19 = sbr.rel (0) target = $region17
  $region16: #{dqn_forward.1} parent=0 // pred_region
    _
  $region17: #{dqn_forward.1} parent=0 // pred_fallthru
    _
  // Predicated region
  $region18: #{dqn_forward.1} parent=0 // pred_check
    _
  $region19: #{dqn_forward.1} parent=0 // pred_check_branch
    %21 = sbr.rel (0) target = $region21
  $region20: #{dqn_forward.1} parent=0 // pred_region
    _
  $region21: #{dqn_forward.1} parent=0 // pred_fallthru
    _
  // Predicated region
  $region22: #{dqn_forward.1} parent=0 // pred_check
    _
  $region23: #{dqn_forward.1} parent=0 // pred_check_branch
    %23 = sbr.rel (0) target = $region25
  $region24: #{dqn_forward.1} parent=0 // pred_region
    _
  $region25: #{dqn_forward.1} parent=0 // pred_fallthru
    _
  // Predicated region
  $region26: #{dqn_forward.1} parent=0 // pred_check
    _
  $region27: #{dqn_forward.1} parent=0 // pred_check_branch
    %25 = sbr.rel (0) target = $region29
  $region28: #{dqn_forward.1} parent=0 // pred_region
    _
  $region29: #{dqn_forward.1} parent=0 // pred_fallthru
    _
  %v27 = vld [vmem:[%s0] sm:$0xff]
  %v28 = vld [vmem:[%s0 + $0x8] sm:$0xff]
  %v29 = vpack.c.bf16 %v28, %v27
  %v30 = vld [vmem:[%s1] sm:$0xf]
  %v31 = vld [vmem:[%s2] sm:$0x1]
  %v33 = vlaneseq
  %v34 = vshrl.u32 %v33, 7
  %v35 = vsub.s32 0, %v34
  %v36 = vrot.slane %v31, %v35
  %vm38 = vcmask 64512
  %v40 = vsel %vm38, %v29, 0
  %vm42 = vcmask 1043456
  %v44 = vsel %vm42, %v30, 0
  %46 = vmatprep.subr.bf16.mxu0 0
  %47 = vmatpush1.bf16.msra.mxu0 0
  %48 = vmatprep.subr.bf16.mxu0 0
  %49 = vmatpush1.bf16.msra.mxu0 0
  %50 = vmatprep.subr.bf16.mxu0 0
  %51 = vmatpush1.bf16.msra.mxu0 0
  %52 = vmatprep.subr.bf16.mxu0 0
  %53 = vmatpush1.bf16.msra.mxu0 0
  %54 = vmatprep.subr.bf16.mxu0 0
  %55 = vmatpush1.bf16.msra.mxu0 0
  %56 = vmatprep.subr.bf16.mxu0 0
  %57 = vmatpush1.bf16.msra.mxu0 0
  %58 = vmatprep.subr.bf16.mxu0 0
  %59 = vmatpush1.bf16.msra.mxu0 0
  %60 = vmatprep.subr.bf16.mxu0 0
  %61 = vmatpush1.bf16.msra.mxu0 %v44
  %62 = vmatprep.subr.bf16.mxu0 0
  %63 = vmatpush2.bf16.msra.mxu0 0
  %64 = vmatprep.subr.bf16.mxu0 0
  %65 = vmatpush2.bf16.msra.mxu0 0
  %66 = vmatprep.subr.bf16.mxu0 0
  %67 = vmatpush2.bf16.msra.mxu0 0
  %68 = vmatprep.subr.bf16.mxu0 0
  %69 = vmatpush2.bf16.msra.mxu0 0
  %70 = vmatprep.subr.bf16.mxu0 0
  %71 = vmatpush2.bf16.msra.mxu0 0
  %72 = vmatprep.subr.bf16.mxu0 0
  %73 = vmatpush2.bf16.msra.mxu0 0
  %74 = vmatprep.subr.bf16.mxu0 0
  %75 = vmatpush2.bf16.msra.mxu0 0
  %76 = vmatprep.subr.bf16.mxu0 0
  %77 = vmatpush2.bf16.msra.mxu0 0
  %78 = vmatprep.mubr.bf16.mxu0 0
  %79 = vmatmul.mubr.bf16.gmra.mxu0 %v40
  %v80 = vpop.f32.mrf.mxu0
  %v81 = vadd.f32 %v36, %v80
  %v82 = vpop.f32.mrf.mxu0
  %v83 = vpop.f32.mrf.mxu0
  %v84 = vadd.f32 %v36, %v83
  %v85 = vpop.f32.mrf.mxu0
  %86 = vdwg.mxu0
  %v87 = vmax.f32 %v81, 0.0
  %v88 = vmax.f32 %v84, 0.0
  %v89 = vpack.c.bf16 %v88, %v87
  %v90 = vld [vmem:[%s3] sm:$0xf]
  %v91 = vld [vmem:[%s3 + $0x4] sm:$0xf]
  %v92 = vld [vmem:[%s3 + $0x8] sm:$0xf]
  %v93 = vld [vmem:[%s3 + $0xc] sm:$0xf]
  %v94 = vld [vmem:[%s4] sm:$0x1]
  %v96 = vlaneseq
  %v97 = vshrl.u32 %v96, 7
  %v98 = vsub.s32 0, %v97
  %v99 = vrot.slane %v94, %v98
  %v105 = vunpack.c.l.b16 %v90
  %v106 = vunpack.c.l.b16 %v91
  %v107 = vunpack.c.l.b16 %v92
  %v108 = vunpack.c.l.b16 %v93
  %v109 = vpack.c.b16 %v106, %v105
  %v110 = vpack.c.b16 %v108, %v107
  %vm113 = vcmask 261120
  %v115 = vsel %vm113, %v89, 0
  %117 = vmatprep.subr.bf16.mxu0 0
  %118 = vmatpush1.bf16.msra.mxu0 0
  %119 = vmatprep.subr.bf16.mxu0 0
  %120 = vmatpush1.bf16.msra.mxu0 0
  %121 = vmatprep.subr.bf16.mxu0 0
  %122 = vmatpush1.bf16.msra.mxu0 0
  %123 = vmatprep.subr.bf16.mxu0 0
  %124 = vmatpush1.bf16.msra.mxu0 0
  %125 = vmatprep.subr.bf16.mxu0 0
  %126 = vmatpush1.bf16.msra.mxu0 0
  %127 = vmatprep.subr.bf16.mxu0 0
  %128 = vmatpush1.bf16.msra.mxu0 0
  %129 = vmatprep.subr.bf16.mxu0 0
  %130 = vmatpush1.bf16.msra.mxu0 %v110
  %131 = vmatprep.subr.bf16.mxu0 0
  %132 = vmatpush1.bf16.msra.mxu0 %v109
  %133 = vmatprep.subr.bf16.mxu0 0
  %134 = vmatpush2.bf16.msra.mxu0 0
  %135 = vmatprep.subr.bf16.mxu0 0
  %136 = vmatpush2.bf16.msra.mxu0 0
  %137 = vmatprep.subr.bf16.mxu0 0
  %138 = vmatpush2.bf16.msra.mxu0 0
  %139 = vmatprep.subr.bf16.mxu0 0
  %140 = vmatpush2.bf16.msra.mxu0 0
  %141 = vmatprep.subr.bf16.mxu0 0
  %142 = vmatpush2.bf16.msra.mxu0 0
  %143 = vmatprep.subr.bf16.mxu0 0
  %144 = vmatpush2.bf16.msra.mxu0 0
  %145 = vmatprep.subr.bf16.mxu0 0
  %146 = vmatpush2.bf16.msra.mxu0 0
  %147 = vmatprep.subr.bf16.mxu0 0
  %148 = vmatpush2.bf16.msra.mxu0 0
  %149 = vmatprep.mubr.bf16.mxu0 0
  %150 = vmatmul.mubr.bf16.gmra.mxu0 %v115
  %v151 = vpop.f32.mrf.mxu0
  %v152 = vadd.f32 %v99, %v151
  %v153 = vpop.f32.mrf.mxu0
  %v154 = vpop.f32.mrf.mxu0
  %v155 = vadd.f32 %v99, %v154
  %v156 = vpop.f32.mrf.mxu0
  %157 = vdwg.mxu0
  %v158 = vmax.f32 %v152, 0.0
  %v159 = vmax.f32 %v155, 0.0
  %v160 = vpack.c.bf16 %v159, %v158
  %v161 = vld [vmem:[%s5] sm:$0xf]
  %v162 = vld [vmem:[%s5 + $0x4] sm:$0xf]
  %v163 = vld [vmem:[%s5 + $0x8] sm:$0xf]
  %v164 = vld [vmem:[%s5 + $0xc] sm:$0xf]
  %v165 = vld [vmem:[%s6] sm:$0x1]
  %v167 = vlaneseq
  %v168 = vshrl.u32 %v167, 7
  %v169 = vsub.s32 0, %v168
  %v170 = vrot.slane %v165, %v169
  %v176 = vunpack.c.l.b16 %v161
  %v177 = vunpack.c.l.b16 %v162
  %v178 = vunpack.c.l.b16 %v163
  %v179 = vunpack.c.l.b16 %v164
  %v180 = vpack.c.b16 %v177, %v176
  %v181 = vpack.c.b16 %v179, %v178
  %v185 = vsel %vm113, %v160, 0
  %187 = vmatprep.subr.bf16.mxu0 0
  %188 = vmatpush1.bf16.msra.mxu0 0
  %189 = vmatprep.subr.bf16.mxu0 0
  %190 = vmatpush1.bf16.msra.mxu0 0
  %191 = vmatprep.subr.bf16.mxu0 0
  %192 = vmatpush1.bf16.msra.mxu0 0
  %193 = vmatprep.subr.bf16.mxu0 0
  %194 = vmatpush1.bf16.msra.mxu0 0
  %195 = vmatprep.subr.bf16.mxu0 0
  %196 = vmatpush1.bf16.msra.mxu0 0
  %197 = vmatprep.subr.bf16.mxu0 0
  %198 = vmatpush1.bf16.msra.mxu0 0
  %199 = vmatprep.subr.bf16.mxu0 0
  %200 = vmatpush1.bf16.msra.mxu0 %v181
  %201 = vmatprep.subr.bf16.mxu0 0
  %202 = vmatpush1.bf16.msra.mxu0 %v180
  %203 = vmatprep.subr.bf16.mxu0 0
  %204 = vmatpush2.bf16.msra.mxu0 0
  %205 = vmatprep.subr.bf16.mxu0 0
  %206 = vmatpush2.bf16.msra.mxu0 0
  %207 = vmatprep.subr.bf16.mxu0 0
  %208 = vmatpush2.bf16.msra.mxu0 0
  %209 = vmatprep.subr.bf16.mxu0 0
  %210 = vmatpush2.bf16.msra.mxu0 0
  %211 = vmatprep.subr.bf16.mxu0 0
  %212 = vmatpush2.bf16.msra.mxu0 0
  %213 = vmatprep.subr.bf16.mxu0 0
  %214 = vmatpush2.bf16.msra.mxu0 0
  %215 = vmatprep.subr.bf16.mxu0 0
  %216 = vmatpush2.bf16.msra.mxu0 0
  %217 = vmatprep.subr.bf16.mxu0 0
  %218 = vmatpush2.bf16.msra.mxu0 0
  %219 = vmatprep.mubr.bf16.mxu0 0
  %220 = vmatmul.mubr.bf16.gmra.mxu0 %v185
  %v221 = vpop.f32.mrf.mxu0
  %v222 = vadd.f32 %v170, %v221
  %v223 = vpop.f32.mrf.mxu0
  %v224 = vpop.f32.mrf.mxu0
  %v225 = vadd.f32 %v170, %v224
  %v226 = vpop.f32.mrf.mxu0
  %227 = vdwg.mxu0
  %vm228 = vcmask 31744
  %229 = vst.msk [vmem:[%s7] sm:$0xff] %vm228, %v222
  %230 = vst.msk [vmem:[%s7 + $0x8] sm:$0xff] %vm228, %v225
  // Predicated region
  $region30: #{dqn_forward.1} parent=0 // pred_check
    _
  $region31: #{dqn_forward.1} parent=0 // pred_check_branch
    %232 = sbr.rel (0) target = $region33
  $region32: #{dqn_forward.1} parent=0 // pred_region
    _
  $region33: #{dqn_forward.1} parent=0 // pred_fallthru
    _
  // Predicated region
  $region34: #{dqn_forward.1} parent=0 // pred_check
    _
  $region35: #{dqn_forward.1} parent=0 // pred_check_branch
    %234 = sbr.rel (0) target = $region37
  $region36: #{dqn_forward.1} parent=0 // pred_region
    _
  $region37: #{dqn_forward.1} parent=0 // pred_fallthru
    _

// kernel: dqn_forward.1
$region0: #{dqn_forward.1}
  #allocation0 [shape = 'u32[]', space=smem, size = 0x4, offset = 0x4, fixed_abs, tag = 'smem constant byte address 0x4 - core index']
  #allocation1 [shape = 'u32[144,128]{1,0:T(1,128)}', space=vmem, size = 0x12000, scoped, tag = 'internal scratch']
  %s0 = inlined_call_operand.vmem [shape: f32[16,8], index: 0, kind: input, shape index: {}]
  %s1 = inlined_call_operand.vmem [shape: bf16[8,32], index: 1, kind: input, shape index: {}]
  %s2 = inlined_call_operand.vmem [shape: f32[1,32], index: 2, kind: input, shape index: {}]
  %s3 = inlined_call_operand.vmem [shape: bf16[32,32], index: 3, kind: input, shape index: {}]
  %s4 = inlined_call_operand.vmem [shape: f32[1,32], index: 4, kind: input, shape index: {}]
  %s5 = inlined_call_operand.vmem [shape: bf16[32,4], index: 5, kind: input, shape index: {}]
  %s6 = inlined_call_operand.vmem [shape: f32[1,4], index: 6, kind: input, shape index: {}]
  %s7 = inlined_call_operand.vmem [shape: f32[16,4], index: 7, kind: output, shape index: {}]
  %s8 = sld [smem:[#allocation0]]
  $region38: #{dqn_forward.1} parent=0
    _
  %s10 = ssub.s32 1, %s8
  %s11 = scalar_select 0, %s10, %s8
  // Predicated region
  $region2: #{dqn_forward.1} parent=0 // pred_check
    _
  $region3: #{dqn_forward.1} parent=0 // pred_check_branch
    %13 = sbr.rel (0) target = $region5
  $region4: #{dqn_forward.1} parent=0 // pred_region
    _
  $region5: #{dqn_forward.1} parent=0 // pred_fallthru
    _
  // Predicated region
  $region6: #{dqn_forward.1} parent=0 // pred_check
    _
  $region7: #{dqn_forward.1} parent=0 // pred_check_branch
    %15 = sbr.rel (0) target = $region9
  $region8: #{dqn_forward.1} parent=0 // pred_region
    _
  $region9: #{dqn_forward.1} parent=0 // pred_fallthru
    _
  // Predicated region
  $region10: #{dqn_forward.1} parent=0 // pred_check
    _
  $region11: #{dqn_forward.1} parent=0 // pred_check_branch
    %17 = sbr.rel (0) target = $region13
  $region12: #{dqn_forward.1} parent=0 // pred_region
    _
  $region13: #{dqn_forward.1} parent=0 // pred_fallthru
    _
  // Predicated region
  $region14: #{dqn_forward.1} parent=0 // pred_check
    _
  $region15: #{dqn_forward.1} parent=0 // pred_check_branch
    %19 = sbr.rel (0) target = $region17
  $region16: #{dqn_forward.1} parent=0 // pred_region
    _
  $region17: #{dqn_forward.1} parent=0 // pred_fallthru
    _
  // Predicated region
  $region18: #{dqn_forward.1} parent=0 // pred_check
    _
  $region19: #{dqn_forward.1} parent=0 // pred_check_branch
    %21 = sbr.rel (0) target = $region21
  $region20: #{dqn_forward.1} parent=0 // pred_region
    _
  $region21: #{dqn_forward.1} parent=0 // pred_fallthru
    _
  // Predicated region
  $region22: #{dqn_forward.1} parent=0 // pred_check
    _
  $region23: #{dqn_forward.1} parent=0 // pred_check_branch
    %23 = sbr.rel (0) target = $region25
  $region24: #{dqn_forward.1} parent=0 // pred_region
    _
  $region25: #{dqn_forward.1} parent=0 // pred_fallthru
    _
  // Predicated region
  $region26: #{dqn_forward.1} parent=0 // pred_check
    _
  $region27: #{dqn_forward.1} parent=0 // pred_check_branch
    %25 = sbr.rel (0) target = $region29
  $region28: #{dqn_forward.1} parent=0 // pred_region
    _
  $region29: #{dqn_forward.1} parent=0 // pred_fallthru
    _
  %v27 = vld [vmem:[%s0] sm:$0xff]
  %v28 = vld [vmem:[%s0 + $0x8] sm:$0xff]
  %v29 = vpack.c.bf16 %v28, %v27
  %v30 = vld [vmem:[%s1] sm:$0xf]
  %v31 = vld [vmem:[%s2] sm:$0x1]
  %v33 = vlaneseq
  %v34 = vshrl.u32 %v33, 7
  %v35 = vsub.s32 0, %v34
  %v36 = vrot.slane %v31, %v35
  %vm38 = vcmask 64512
  %v40 = vsel %vm38, %v29, 0
  %vm42 = vcmask 1043456
  %v44 = vsel %vm42, %v30, 0
  %46 = vmatprep.subr.bf16.mxu0 0
  %47 = vmatpush1.bf16.msra.mxu0 0
  %48 = vmatprep.subr.bf16.mxu0 0
  %49 = vmatpush1.bf16.msra.mxu0 0
  %50 = vmatprep.subr.bf16.mxu0 0
  %51 = vmatpush1.bf16.msra.mxu0 0
  %52 = vmatprep.subr.bf16.mxu0 0
  %53 = vmatpush1.bf16.msra.mxu0 0
  %54 = vmatprep.subr.bf16.mxu0 0
  %55 = vmatpush1.bf16.msra.mxu0 0
  %56 = vmatprep.subr.bf16.mxu0 0
  %57 = vmatpush1.bf16.msra.mxu0 0
  %58 = vmatprep.subr.bf16.mxu0 0
  %59 = vmatpush1.bf16.msra.mxu0 0
  %60 = vmatprep.subr.bf16.mxu0 0
  %61 = vmatpush1.bf16.msra.mxu0 %v44
  %62 = vmatprep.subr.bf16.mxu0 0
  %63 = vmatpush2.bf16.msra.mxu0 0
  %64 = vmatprep.subr.bf16.mxu0 0
  %65 = vmatpush2.bf16.msra.mxu0 0
  %66 = vmatprep.subr.bf16.mxu0 0
  %67 = vmatpush2.bf16.msra.mxu0 0
  %68 = vmatprep.subr.bf16.mxu0 0
  %69 = vmatpush2.bf16.msra.mxu0 0
  %70 = vmatprep.subr.bf16.mxu0 0
  %71 = vmatpush2.bf16.msra.mxu0 0
  %72 = vmatprep.subr.bf16.mxu0 0
  %73 = vmatpush2.bf16.msra.mxu0 0
  %74 = vmatprep.subr.bf16.mxu0 0
  %75 = vmatpush2.bf16.msra.mxu0 0
  %76 = vmatprep.subr.bf16.mxu0 0
  %77 = vmatpush2.bf16.msra.mxu0 0
  %78 = vmatprep.mubr.bf16.mxu0 0
  %79 = vmatmul.mubr.bf16.gmra.mxu0 %v40
  %v80 = vpop.f32.mrf.mxu0
  %v81 = vadd.f32 %v36, %v80
  %v82 = vpop.f32.mrf.mxu0
  %v83 = vpop.f32.mrf.mxu0
  %v84 = vadd.f32 %v36, %v83
  %v85 = vpop.f32.mrf.mxu0
  %86 = vdwg.mxu0
  %v87 = vmax.f32 %v81, 0.0
  %v88 = vmax.f32 %v84, 0.0
  %v89 = vpack.c.bf16 %v88, %v87
  %v90 = vld [vmem:[%s3] sm:$0xf]
  %v91 = vld [vmem:[%s3 + $0x4] sm:$0xf]
  %v92 = vld [vmem:[%s3 + $0x8] sm:$0xf]
  %v93 = vld [vmem:[%s3 + $0xc] sm:$0xf]
  %v94 = vld [vmem:[%s4] sm:$0x1]
  %v96 = vlaneseq
  %v97 = vshrl.u32 %v96, 7
  %v98 = vsub.s32 0, %v97
  %v99 = vrot.slane %v94, %v98
  %v105 = vunpack.c.l.b16 %v90
  %v106 = vunpack.c.l.b16 %v91
  %v107 = vunpack.c.l.b16 %v92
  %v108 = vunpack.c.l.b16 %v93
  %v109 = vpack.c.b16 %v106, %v105
  %v110 = vpack.c.b16 %v108, %v107
  %vm113 = vcmask 261120
  %v115 = vsel %vm113, %v89, 0
  %117 = vmatprep.subr.bf16.mxu0 0
  %118 = vmatpush1.bf16.msra.mxu0 0
  %119 = vmatprep.subr.bf16.mxu0 0
  %120 = vmatpush1.bf16.msra.mxu0 0
  %121 = vmatprep.subr.bf16.mxu0 0
  %122 = vmatpush1.bf16.msra.mxu0 0
  %123 = vmatprep.subr.bf16.mxu0 0
  %124 = vmatpush1.bf16.msra.mxu0 0
  %125 = vmatprep.subr.bf16.mxu0 0
  %126 = vmatpush1.bf16.msra.mxu0 0
  %127 = vmatprep.subr.bf16.mxu0 0
  %128 = vmatpush1.bf16.msra.mxu0 0
  %129 = vmatprep.subr.bf16.mxu0 0
  %130 = vmatpush1.bf16.msra.mxu0 %v110
  %131 = vmatprep.subr.bf16.mxu0 0
  %132 = vmatpush1.bf16.msra.mxu0 %v109
  %133 = vmatprep.subr.bf16.mxu0 0
  %134 = vmatpush2.bf16.msra.mxu0 0
  %135 = vmatprep.subr.bf16.mxu0 0
  %136 = vmatpush2.bf16.msra.mxu0 0
  %137 = vmatprep.subr.bf16.mxu0 0
  %138 = vmatpush2.bf16.msra.mxu0 0
  %139 = vmatprep.subr.bf16.mxu0 0
  %140 = vmatpush2.bf16.msra.mxu0 0
  %141 = vmatprep.subr.bf16.mxu0 0
  %142 = vmatpush2.bf16.msra.mxu0 0
  %143 = vmatprep.subr.bf16.mxu0 0
  %144 = vmatpush2.bf16.msra.mxu0 0
  %145 = vmatprep.subr.bf16.mxu0 0
  %146 = vmatpush2.bf16.msra.mxu0 0
  %147 = vmatprep.subr.bf16.mxu0 0
  %148 = vmatpush2.bf16.msra.mxu0 0
  %149 = vmatprep.mubr.bf16.mxu0 0
  %150 = vmatmul.mubr.bf16.gmra.mxu0 %v115
  %v151 = vpop.f32.mrf.mxu0
  %v152 = vadd.f32 %v99, %v151
  %v153 = vpop.f32.mrf.mxu0
  %v154 = vpop.f32.mrf.mxu0
  %v155 = vadd.f32 %v99, %v154
  %v156 = vpop.f32.mrf.mxu0
  %157 = vdwg.mxu0
  %v158 = vmax.f32 %v152, 0.0
  %v159 = vmax.f32 %v155, 0.0
  %v160 = vpack.c.bf16 %v159, %v158
  %v161 = vld [vmem:[%s5] sm:$0xf]
  %v162 = vld [vmem:[%s5 + $0x4] sm:$0xf]
  %v163 = vld [vmem:[%s5 + $0x8] sm:$0xf]
  %v164 = vld [vmem:[%s5 + $0xc] sm:$0xf]
  %v165 = vld [vmem:[%s6] sm:$0x1]
  %v167 = vlaneseq
  %v168 = vshrl.u32 %v167, 7
  %v169 = vsub.s32 0, %v168
  %v170 = vrot.slane %v165, %v169
  %v176 = vunpack.c.l.b16 %v161
  %v177 = vunpack.c.l.b16 %v162
  %v178 = vunpack.c.l.b16 %v163
  %v179 = vunpack.c.l.b16 %v164
  %v180 = vpack.c.b16 %v177, %v176
  %v181 = vpack.c.b16 %v179, %v178
  %v185 = vsel %vm113, %v160, 0
  %187 = vmatprep.subr.bf16.mxu0 0
  %188 = vmatpush1.bf16.msra.mxu0 0
  %189 = vmatprep.subr.bf16.mxu0 0
  %190 = vmatpush1.bf16.msra.mxu0 0
  %191 = vmatprep.subr.bf16.mxu0 0
  %192 = vmatpush1.bf16.msra.mxu0 0
  %193 = vmatprep.subr.bf16.mxu0 0
  %194 = vmatpush1.bf16.msra.mxu0 0
  %195 = vmatprep.subr.bf16.mxu0 0
  %196 = vmatpush1.bf16.msra.mxu0 0
  %197 = vmatprep.subr.bf16.mxu0 0
  %198 = vmatpush1.bf16.msra.mxu0 0
  %199 = vmatprep.subr.bf16.mxu0 0
  %200 = vmatpush1.bf16.msra.mxu0 %v181
  %201 = vmatprep.subr.bf16.mxu0 0
  %202 = vmatpush1.bf16.msra.mxu0 %v180
  %203 = vmatprep.subr.bf16.mxu0 0
  %204 = vmatpush2.bf16.msra.mxu0 0
  %205 = vmatprep.subr.bf16.mxu0 0
  %206 = vmatpush2.bf16.msra.mxu0 0
  %207 = vmatprep.subr.bf16.mxu0 0
  %208 = vmatpush2.bf16.msra.mxu0 0
  %209 = vmatprep.subr.bf16.mxu0 0
  %210 = vmatpush2.bf16.msra.mxu0 0
  %211 = vmatprep.subr.bf16.mxu0 0
  %212 = vmatpush2.bf16.msra.mxu0 0
  %213 = vmatprep.subr.bf16.mxu0 0
  %214 = vmatpush2.bf16.msra.mxu0 0
  %215 = vmatprep.subr.bf16.mxu0 0
  %216 = vmatpush2.bf16.msra.mxu0 0
  %217 = vmatprep.subr.bf16.mxu0 0
  %218 = vmatpush2.bf16.msra.mxu0 0
  %219 = vmatprep.mubr.bf16.mxu0 0
  %220 = vmatmul.mubr.bf16.gmra.mxu0 %v185
  %v221 = vpop.f32.mrf.mxu0
  %v222 = vadd.f32 %v170, %v221
  %v223 = vpop.f32.mrf.mxu0
  %v224 = vpop.f32.mrf.mxu0
  %v225 = vadd.f32 %v170, %v224
  %v226 = vpop.f32.mrf.mxu0
  %227 = vdwg.mxu0
  %vm228 = vcmask 31744
  %229 = vst.msk [vmem:[%s7] sm:$0xff] %vm228, %v222
  %230 = vst.msk [vmem:[%s7 + $0x8] sm:$0xff] %vm228, %v225
  // Predicated region
  $region30: #{dqn_forward.1} parent=0 // pred_check
    _
  $region31: #{dqn_forward.1} parent=0 // pred_check_branch
    %232 = sbr.rel (0) target = $region33
  $region32: #{dqn_forward.1} parent=0 // pred_region
    _
  $region33: #{dqn_forward.1} parent=0 // pred_fallthru
    _
  // Predicated region
  $region34: #{dqn_forward.1} parent=0 // pred_check
    _
  $region35: #{dqn_forward.1} parent=0 // pred_check_branch
    %234 = sbr.rel (0) target = $region37
  $region36: #{dqn_forward.1} parent=0 // pred_region
    _
  $region37: #{dqn_forward.1} parent=0 // pred_fallthru
    _

</llo_original>
